<compile_context>
chip_gen: v6e
topology: v6e:2x2x1
jax: 0.10.0
libtpu: 0.0.40
codegen_flags: <defaults>
</compile_context>

<pallas_src>
import functools

import jax
import jax.numpy as jnp
from jax.experimental import pallas as pl
from jax.experimental.pallas import tpu as pltpu


# ----------------------------------------------------------------------------
# Glue: spherical padding / trimming (pure layout ops, plain JAX)
# ----------------------------------------------------------------------------
def sphere_pad(x, p):
    """Equirectangular spherical padding of an NCHW tensor by p pixels."""
    # TODO(synk): SpherePad reference implementation not provided; this is the
    # standard equirectangular sphere-padding convention.
    n, c, h, w = x.shape
    left = x[..., w - p:]
    right = x[..., :p]
    xw = jnp.concatenate([left, x, right], axis=-1)          # (n, c, h, w+2p)
    wp = w + 2 * p
    shift = wp // 2
    top = jnp.roll(jnp.flip(xw[:, :, :p, :], axis=2), shift, axis=3)
    bot = jnp.roll(jnp.flip(xw[:, :, h - p:, :], axis=2), shift, axis=3)
    return jnp.concatenate([top, xw, bot], axis=2)            # (n, c, h+2p, w+2p)


def sphere_trim(x, p):
    """Crop p pixels from every spatial border of an NCHW tensor."""
    # TODO(synk): SphereTrim reference implementation not provided; interpreted
    # as a border crop of width p (the inverse of the sphere padding).
    return x[:, :, p:-p, p:-p]


def _round_up(x, m):
    return (x + m - 1) // m * m


# ----------------------------------------------------------------------------
# Pallas kernel: lane-dense GEMM + bias (the conv hot path, post-im2col)
# ----------------------------------------------------------------------------
def _gemm_bias_kernel(x_ref, w_ref, b_ref, o_ref):
    """x_ref: (TM, K) bf16   w_ref: (K, TN) bf16
    b_ref: (1, TN) f32      o_ref: (TM, TN) f32
    One grid step = one (TM, TN) output tile: a single MXU GEMM with f32
    accumulation, bias add and cast done in f32."""
    acc = jnp.dot(x_ref[...], w_ref[...], preferred_element_type=jnp.float32)
    o_ref[...] = (acc + b_ref[...]).astype(o_ref.dtype)


def pallas_conv2d_valid(x_nhwc, weight, bias, stride, *, tile_m=256, tile_n=128):
    """Valid 2D conv of a pre-padded NHWC input with an OIHW weight.

    Implemented as wrapper-side im2col + a tiled Pallas GEMM so the MXU sees
    (tile_m, KH*KW*Cin) @ (KH*KW*Cin, Cout_pad) with lane-dense outputs.
    """
    n, hp, wp, cin = x_nhwc.shape
    cout, cin_w, kh_sz, kw_sz = weight.shape
    assert cin_w == cin
    oh = (hp - kh_sz) // stride + 1
    ow = (wp - kw_sz) // stride + 1

    # --- im2col (layout plumbing; stride handled here with unit-stride kernel loads)
    # K axis ordered (kh, kw, cin) to match the weight flattening below.
    cols = []
    for kh in range(kh_sz):
        for kw in range(kw_sz):
            cols.append(
                x_nhwc[:, kh:kh + (oh - 1) * stride + 1:stride,
                          kw:kw + (ow - 1) * stride + 1:stride, :])
    patches = jnp.concatenate(cols, axis=-1)                  # (N, OH, OW, KH*KW*Cin)
    k_dim = kh_sz * kw_sz * cin
    m_dim = n * oh * ow
    patches = patches.reshape(m_dim, k_dim).astype(jnp.bfloat16)

    # --- pad M so it tiles; pad Cout (and bias) to a lane-dense multiple of 128
    m_pad = _round_up(m_dim, tile_m)
    cout_pad = _round_up(cout, tile_n)
    if m_pad != m_dim:
        patches = jnp.pad(patches, ((0, m_pad - m_dim), (0, 0)))

    # (Cout, Cin, KH, KW) -> (KH*KW*Cin, Cout_pad) contiguous GEMM RHS slab
    w_r = jnp.transpose(weight, (2, 3, 1, 0)).reshape(k_dim, cout)
    w_r = jnp.pad(w_r, ((0, 0), (0, cout_pad - cout))).astype(jnp.bfloat16)
    b_r = jnp.pad(bias, (0, cout_pad - cout)).reshape(1, cout_pad).astype(jnp.float32)

    out = pl.pallas_call(
        _gemm_bias_kernel,
        out_shape=jax.ShapeDtypeStruct((m_pad, cout_pad), x_nhwc.dtype),
        grid_spec=pltpu.PrefetchScalarGridSpec(
            num_scalar_prefetch=0,
            grid=(m_pad // tile_m, cout_pad // tile_n),
            in_specs=[
                pl.BlockSpec((tile_m, k_dim), lambda i, j: (i, 0)),
                pl.BlockSpec((k_dim, tile_n), lambda i, j: (0, j)),
                pl.BlockSpec((1, tile_n), lambda i, j: (0, j)),
            ],
            out_specs=pl.BlockSpec((tile_m, tile_n), lambda i, j: (i, j)),
        ),
        compiler_params=pltpu.CompilerParams(
            dimension_semantics=("parallel", "parallel")),
    )(patches, w_r, b_r)

    # slice off the M / Cout zero padding and restore NHWC
    return out[:m_dim, :cout].reshape(n, oh, ow, cout)


# ----------------------------------------------------------------------------
# SphereConv3 forward
# ----------------------------------------------------------------------------
def sphere_conv3_forward(x, weight, bias, *, stride, conv_pad):
    """x: (N, Cin, H, W) NCHW.  Returns NCHW output, matching
    SphereTrim(Conv2d(SpherePad(x)))."""
    p_sphere = 2
    xp = sphere_pad(x, p_sphere)
    if conv_pad > 0:  # Conv2d's own zero padding
        xp = jnp.pad(xp, ((0, 0), (0, 0), (conv_pad, conv_pad), (conv_pad, conv_pad)))
    x_nhwc = jnp.transpose(xp, (0, 2, 3, 1))
    y_nhwc = pallas_conv2d_valid(x_nhwc, weight, bias, stride)
    y = jnp.transpose(y_nhwc, (0, 3, 1, 2))                   # back to NCHW
    return sphere_trim(y, p_sphere)


# ----------------------------------------------------------------------------
# Demo / self-check
# ----------------------------------------------------------------------------
if __name__ == "__main__":
    key = jax.random.PRNGKey(0)
    N, Cin, H, W = 2, 4, 16, 16
    Cout, K, STRIDE, CONV_PAD = 8, 3, 1, 1

    kx, kw_, kb = jax.random.split(key, 3)
    x = jax.random.normal(kx, (N, Cin, H, W), jnp.float32)

    # Deterministic Conv2d parameter init (PyTorch-style uniform(-b, b), b=1/sqrt(fan_in))
    fan_in = Cin * K * K
    bound = 1.0 / (fan_in ** 0.5)
    weight = jax.random.uniform(kw_, (Cout, Cin, K, K), jnp.float32, -bound, bound)
    bias = jax.random.uniform(kb, (Cout,), jnp.float32, -bound, bound)

    fwd = jax.jit(functools.partial(sphere_conv3_forward, stride=STRIDE, conv_pad=CONV_PAD))
    y = fwd(x, weight, bias)
    y = jax.block_until_ready(y)

    # Reference check with XLA's f32 conv on the identically-padded input.
    xp_ref = sphere_pad(x, 2)
    ref = jax.lax.conv_general_dilated(
        xp_ref, weight, (STRIDE, STRIDE), [(CONV_PAD, CONV_PAD)] * 2,
        dimension_numbers=("NCHW", "OIHW", "NCHW"),
        precision=jax.lax.Precision.HIGHEST) + bias[None, :, None, None]
    ref = sphere_trim(ref, 2)

    assert y.shape == ref.shape == (N, Cout, H, W), (y.shape, ref.shape)
    # bf16 operands / f32 accumulation vs f32 reference
    assert jnp.allclose(y, ref, atol=5e-2, rtol=5e-2), float(jnp.max(jnp.abs(y - ref)))
    print("KERNEL_OK")
</pallas_src>

<mosaic_0001>
module attributes {stable_mosaic.version = 11 : i64} {
  func.func @_gemm_bias_kernel(%arg0: i32, %arg1: i32, %arg2: memref<256x36xbf16, #tpu.memory_space<vmem>>, %arg3: memref<36x128xbf16, #tpu.memory_space<vmem>>, %arg4: memref<1x128xf32, #tpu.memory_space<vmem>>, %arg5: memref<256x128xf32, #tpu.memory_space<vmem>>) attributes {dimension_semantics = [#tpu.dimension_semantics<parallel>, #tpu.dimension_semantics<parallel>], iteration_bounds = array<i64: 4, 1>, scalar_prefetch = 0 : i64, scratch_operands = 0 : i64, tpu.core_type = #tpu.core_type<tc>, window_params = [{transform_indices = @transform_0, window_bounds = array<i64: 256, 36>}, {transform_indices = @transform_1, window_bounds = array<i64: 36, 128>}, {transform_indices = @transform_2, window_bounds = array<i64: 1, 128>}, {transform_indices = @transform_3, window_bounds = array<i64: 256, 128>}]} {
    %c0 = arith.constant 0 : index
    %c0_0 = arith.constant 0 : index
    %0 = vector.load %arg2[%c0, %c0_0] : memref<256x36xbf16, #tpu.memory_space<vmem>>, vector<256x36xbf16>
    %c0_1 = arith.constant 0 : index
    %c0_2 = arith.constant 0 : index
    %1 = vector.load %arg3[%c0_1, %c0_2] : memref<36x128xbf16, #tpu.memory_space<vmem>>, vector<36x128xbf16>
    %cst = arith.constant dense<0.000000e+00> : vector<256x128xf32>
    %2 = tpu.matmul %0, %1, %cst {dimension_numbers = #tpu.dot_dimension_numbers<[1], [0], [0], [1], [0, 0, 1, 1], [], []>} : vector<256x36xbf16>, vector<36x128xbf16>, vector<256x128xf32> -> vector<256x128xf32>
    %c0_3 = arith.constant 0 : index
    %c0_4 = arith.constant 0 : index
    %3 = vector.load %arg4[%c0_3, %c0_4] : memref<1x128xf32, #tpu.memory_space<vmem>>, vector<1x128xf32>
    %4 = vector.broadcast %3 : vector<1x128xf32> to vector<256x128xf32>
    %5 = arith.addf %2, %4 : vector<256x128xf32>
    %c0_5 = arith.constant 0 : index
    %c0_6 = arith.constant 0 : index
    %6 = vector.load %arg5[%c0_5, %c0_6] : memref<256x128xf32, #tpu.memory_space<vmem>>, vector<256x128xf32>
    tpu.vector_store %arg5[%c0_5, %c0_6], %5 {strides = array<i32>} : memref<256x128xf32, #tpu.memory_space<vmem>>, vector<256x128xf32>,
    return
  }
  func.func @transform_0(%arg0: i32, %arg1: i32) -> (i32, i32) {
    %c0_i32 = arith.constant 0 : i32
    %c0_i32_0 = arith.constant 0 : i32
    return %arg0, %c0_i32 : i32, i32
  }
  func.func @transform_1(%arg0: i32, %arg1: i32) -> (i32, i32) {
    %c0_i32 = arith.constant 0 : i32
    %c0_i32_0 = arith.constant 0 : i32
    return %c0_i32, %arg1 : i32, i32
  }
  func.func @transform_2(%arg0: i32, %arg1: i32) -> (i32, i32) {
    %c0_i32 = arith.constant 0 : i32
    %c0_i32_0 = arith.constant 0 : i32
    return %c0_i32, %arg1 : i32, i32
  }
  func.func @transform_3(%arg0: i32, %arg1: i32) -> (i32, i32) {
    %c0_i32 = arith.constant 0 : i32
    return %arg0, %arg1 : i32, i32
  }
}

</mosaic_0001>

<llo_original>
// kernel: reverse
$region0: #{reverse}
  %s0 = inlined_call_operand.vmem [shape: bf16[2,4,2,10], index: 0, kind: input, shape index: {}]
  %s1 = inlined_call_operand.vmem [shape: bf16[2,4,2,10], index: 1, kind: output, shape index: {}]
  $region1: #{reverse} parent=0
    #allocation0 [shape = 'u8[65536]{0}', space=vmem, size = 0x10000, scoped, tag = 'operand span for operand 0']
    #allocation1 [shape = 'u8[8192]{0}', space=vmem, size = 0x2000, scoped, tag = 'packed  for operand 0']
    #allocation2 [shape = 'u8[32768]{0}', space=vmem, size = 0x8000, scoped, tag = 'operand span for operand 1']
    #allocation3 [shape = 'u8[4096]{0}', space=vmem, size = 0x1000, scoped, tag = 'packed  for operand 1']
    %s2 = scalar_lea.vmem [#allocation1], 1
    // Predicated region
    $region2: #{reverse} parent=1 // pred_check
      _
    $region3: #{reverse} parent=1 // pred_check_branch
      %4 = sbr.rel (0) target = $region5
    $region4: #{reverse} parent=1 // pred_region
      // Predicated region
      $region6: #{reverse} parent=4 // pred_check
        _
      $region7: #{reverse} parent=4 // pred_check_branch
        %6 = sbr.rel target = $region9
      $region8: #{reverse} parent=4 // pred_region
        // Predicated region
        $region21: #{reverse} parent=8 // pred_check
          _
        $region22: #{reverse} parent=8 // pred_check_branch
          %36 = sbr.rel (0) target = $region24
        $region23: #{reverse} parent=8 // pred_region
          loop: start=0, step=1, limit=1
          $region25: #{reverse} parent=23 // loop_pre_header
            _
          $region26: #{reverse} parent=23 // loop_header
            %s38 = sphi 0, %s42
            %p39 = scmp.ge.s32.totalorder %s38, 1
            %s43 = sphi %s0, %s0
            %s44 = sphi %s2, %s2
          $region27: #{reverse} parent=23 // loop_header_branch
            %41 = sbr.rel (%p39) target = $region31
          $region28: #{reverse} parent=23 // loop_body
            _
          $region29: #{reverse} parent=23 // loop_footer
            %s42 = sadd.s32 1, %s38
          $region30: #{reverse} parent=23 // loop_footer_branch
            %37 = sbr.rel target = $region26
          $region31: #{reverse} parent=23 // loop_exit
            _
          %s46 = ssub.s32 2, 1
          loop: start=0, step=1, limit=1
          $region32: #{reverse} parent=23 // loop_pre_header
            _
          $region33: #{reverse} parent=23 // loop_header
            %s48 = sphi 0, %s52
            %p49 = scmp.ge.s32.totalorder %s48, 1
            %s53 = sphi %s0, %s0
            %s54 = sphi %s2, %s2
          $region34: #{reverse} parent=23 // loop_header_branch
            %51 = sbr.rel (%p49) target = $region38
          $region35: #{reverse} parent=23 // loop_body
            %v55 = vld [vmem:[%s53] sm:%s46]
            %56 = vst [vmem:[%s54] sm:%s46] %v55
            %v57 = vld [vmem:[%s53 + $0x1] sm:%s46]
            %58 = vst [vmem:[%s54 + $0x2] sm:%s46] %v57
            %v59 = vld [vmem:[%s53 + $0x2] sm:%s46]
            %60 = vst [vmem:[%s54 + $0x4] sm:%s46] %v59
            %v61 = vld [vmem:[%s53 + $0x3] sm:%s46]
            %62 = vst [vmem:[%s54 + $0x6] sm:%s46] %v61
            %v63 = vld [vmem:[%s53 + $0x4] sm:%s46]
            %64 = vst [vmem:[%s54 + $0x8] sm:%s46] %v63
            %v65 = vld [vmem:[%s53 + $0x5] sm:%s46]
            %66 = vst [vmem:[%s54 + $0xa] sm:%s46] %v65
            %v67 = vld [vmem:[%s53 + $0x6] sm:%s46]
            %68 = vst [vmem:[%s54 + $0xc] sm:%s46] %v67
            %v69 = vld [vmem:[%s53 + $0x7] sm:%s46]
            %70 = vst [vmem:[%s54 + $0xe] sm:%s46] %v69
          $region36: #{reverse} parent=23 // loop_footer
            %s52 = sadd.s32 1, %s48
          $region37: #{reverse} parent=23 // loop_footer_branch
            %47 = sbr.rel target = $region33
          $region38: #{reverse} parent=23 // loop_exit
            _
        $region24: #{reverse} parent=8 // pred_fallthru
          _
      $region9: #{reverse} parent=4 // pred_fallthru
        _
      // Predicated region
      $region10: #{reverse} parent=4 // pred_check
        _
      $region11: #{reverse} parent=4 // pred_check_branch
        %8 = sbr.rel (0) target = $region13
      $region12: #{reverse} parent=4 // pred_region
        %s10 = ssub.s32 2, 1
        loop: start=0, step=1, limit=1
        $region14: #{reverse} parent=12 // loop_pre_header
          _
        $region15: #{reverse} parent=12 // loop_header
          %s12 = sphi 0, %s16
          %p13 = scmp.ge.s32.totalorder %s12, 1
          %s17 = sphi %s0, %s0
          %s18 = sphi %s2, %s2
        $region16: #{reverse} parent=12 // loop_header_branch
          %15 = sbr.rel (%p13) target = $region20
        $region17: #{reverse} parent=12 // loop_body
          %v19 = vld [vmem:[%s17] sm:%s10]
          %20 = vst [vmem:[%s18] sm:%s10] %v19
          %v21 = vld [vmem:[%s17 + $0x1] sm:%s10]
          %22 = vst [vmem:[%s18 + $0x2] sm:%s10] %v21
          %v23 = vld [vmem:[%s17 + $0x2] sm:%s10]
          %24 = vst [vmem:[%s18 + $0x4] sm:%s10] %v23
          %v25 = vld [vmem:[%s17 + $0x3] sm:%s10]
          %26 = vst [vmem:[%s18 + $0x6] sm:%s10] %v25
          %v27 = vld [vmem:[%s17 + $0x4] sm:%s10]
          %28 = vst [vmem:[%s18 + $0x8] sm:%s10] %v27
          %v29 = vld [vmem:[%s17 + $0x5] sm:%s10]
          %30 = vst [vmem:[%s18 + $0xa] sm:%s10] %v29
          %v31 = vld [vmem:[%s17 + $0x6] sm:%s10]
          %32 = vst [vmem:[%s18 + $0xc] sm:%s10] %v31
          %v33 = vld [vmem:[%s17 + $0x7] sm:%s10]
          %34 = vst [vmem:[%s18 + $0xe] sm:%s10] %v33
        $region18: #{reverse} parent=12 // loop_footer
          %s16 = sadd.s32 1, %s12
        $region19: #{reverse} parent=12 // loop_footer_branch
          %11 = sbr.rel target = $region15
        $region20: #{reverse} parent=12 // loop_exit
          _
      $region13: #{reverse} parent=4 // pred_fallthru
        _
    $region5: #{reverse} parent=1 // pred_fallthru
      _
    %71 = vnop
    %s73 = smul.u32 1, 2
    %s74 = sshll.u32 1, %s73
    %s75 = ssub.s32 %s74, 1
    %s76 = smul.addr 1, 15
    %s77 = scalar_lea.vmem [#allocation1], %s76
    %s78 = sshrl.u32 %s75, 1
    %s79 = sor.u32 %s75, %s78
    %s80 = sand.u32 %s79, 85
    %s81 = sshrl.u32 %s80, 1
    %s82 = sor.u32 %s80, %s81
    %s83 = sand.u32 51, %s82
    %s84 = sshrl.u32 %s83, 2
    %s85 = sor.u32 %s83, %s84
    %s86 = sand.u32 15, %s85
    %v87 = vld [vmem:[%s77] sm:%s86]
    %v88 = vunpack.c.l.bf16 %v87
    %v89 = vunpack.c.h.bf16 %v87
    %s90 = scalar_lea.vmem [#allocation0], 120
    %91 = vst [vmem:[%s90] sm:%s75] %v88
    %s92 = smul.addr 1, 14
    %s93 = scalar_lea.vmem [#allocation1], %s92
    %s94 = sshrl.u32 %s75, 1
    %s95 = sor.u32 %s75, %s94
    %s96 = sand.u32 %s95, 85
    %s97 = sshrl.u32 %s96, 1
    %s98 = sor.u32 %s96, %s97
    %s99 = sand.u32 51, %s98
    %s100 = sshrl.u32 %s99, 2
    %s101 = sor.u32 %s99, %s100
    %s102 = sand.u32 15, %s101
    %v103 = vld [vmem:[%s93] sm:%s102]
    %v104 = vunpack.c.l.bf16 %v103
    %v105 = vunpack.c.h.bf16 %v103
    %s106 = scalar_lea.vmem [#allocation0], 112
    %107 = vst [vmem:[%s106] sm:%s75] %v104
    %s108 = smul.addr 1, 13
    %s109 = scalar_lea.vmem [#allocation1], %s108
    %s110 = sshrl.u32 %s75, 1
    %s111 = sor.u32 %s75, %s110
    %s112 = sand.u32 %s111, 85
    %s113 = sshrl.u32 %s112, 1
    %s114 = sor.u32 %s112, %s113
    %s115 = sand.u32 51, %s114
    %s116 = sshrl.u32 %s115, 2
    %s117 = sor.u32 %s115, %s116
    %s118 = sand.u32 15, %s117
    %v119 = vld [vmem:[%s109] sm:%s118]
    %v120 = vunpack.c.l.bf16 %v119
    %v121 = vunpack.c.h.bf16 %v119
    %s122 = scalar_lea.vmem [#allocation0], 104
    %123 = vst [vmem:[%s122] sm:%s75] %v120
    %s124 = smul.addr 1, 12
    %s125 = scalar_lea.vmem [#allocation1], %s124
    %s126 = sshrl.u32 %s75, 1
    %s127 = sor.u32 %s75, %s126
    %s128 = sand.u32 %s127, 85
    %s129 = sshrl.u32 %s128, 1
    %s130 = sor.u32 %s128, %s129
    %s131 = sand.u32 51, %s130
    %s132 = sshrl.u32 %s131, 2
    %s133 = sor.u32 %s131, %s132
    %s134 = sand.u32 15, %s133
    %v135 = vld [vmem:[%s125] sm:%s134]
    %v136 = vunpack.c.l.bf16 %v135
    %v137 = vunpack.c.h.bf16 %v135
    %s138 = scalar_lea.vmem [#allocation0], 96
    %139 = vst [vmem:[%s138] sm:%s75] %v136
    %s140 = smul.addr 1, 11
    %s141 = scalar_lea.vmem [#allocation1], %s140
    %s142 = sshrl.u32 %s75, 1
    %s143 = sor.u32 %s75, %s142
    %s144 = sand.u32 %s143, 85
    %s145 = sshrl.u32 %s144, 1
    %s146 = sor.u32 %s144, %s145
    %s147 = sand.u32 51, %s146
    %s148 = sshrl.u32 %s147, 2
    %s149 = sor.u32 %s147, %s148
    %s150 = sand.u32 15, %s149
    %v151 = vld [vmem:[%s141] sm:%s150]
    %v152 = vunpack.c.l.bf16 %v151
    %v153 = vunpack.c.h.bf16 %v151
    %s154 = scalar_lea.vmem [#allocation0], 88
    %155 = vst [vmem:[%s154] sm:%s75] %v152
    %s156 = smul.addr 1, 10
    %s157 = scalar_lea.vmem [#allocation1], %s156
    %s158 = sshrl.u32 %s75, 1
    %s159 = sor.u32 %s75, %s158
    %s160 = sand.u32 %s159, 85
    %s161 = sshrl.u32 %s160, 1
    %s162 = sor.u32 %s160, %s161
    %s163 = sand.u32 51, %s162
    %s164 = sshrl.u32 %s163, 2
    %s165 = sor.u32 %s163, %s164
    %s166 = sand.u32 15, %s165
    %v167 = vld [vmem:[%s157] sm:%s166]
    %v168 = vunpack.c.l.bf16 %v167
    %v169 = vunpack.c.h.bf16 %v167
    %s170 = scalar_lea.vmem [#allocation0], 80
    %171 = vst [vmem:[%s170] sm:%s75] %v168
    %s172 = smul.addr 1, 9
    %s173 = scalar_lea.vmem [#allocation1], %s172
    %s174 = sshrl.u32 %s75, 1
    %s175 = sor.u32 %s75, %s174
    %s176 = sand.u32 %s175, 85
    %s177 = sshrl.u32 %s176, 1
    %s178 = sor.u32 %s176, %s177
    %s179 = sand.u32 51, %s178
    %s180 = sshrl.u32 %s179, 2
    %s181 = sor.u32 %s179, %s180
    %s182 = sand.u32 15, %s181
    %v183 = vld [vmem:[%s173] sm:%s182]
    %v184 = vunpack.c.l.bf16 %v183
    %v185 = vunpack.c.h.bf16 %v183
    %s186 = scalar_lea.vmem [#allocation0], 72
    %187 = vst [vmem:[%s186] sm:%s75] %v184
    %s188 = smul.addr 1, 8
    %s189 = scalar_lea.vmem [#allocation1], %s188
    %s190 = sshrl.u32 %s75, 1
    %s191 = sor.u32 %s75, %s190
    %s192 = sand.u32 %s191, 85
    %s193 = sshrl.u32 %s192, 1
    %s194 = sor.u32 %s192, %s193
    %s195 = sand.u32 51, %s194
    %s196 = sshrl.u32 %s195, 2
    %s197 = sor.u32 %s195, %s196
    %s198 = sand.u32 15, %s197
    %v199 = vld [vmem:[%s189] sm:%s198]
    %v200 = vunpack.c.l.bf16 %v199
    %v201 = vunpack.c.h.bf16 %v199
    %s202 = scalar_lea.vmem [#allocation0], 64
    %203 = vst [vmem:[%s202] sm:%s75] %v200
    %s204 = smul.addr 1, 7
    %s205 = scalar_lea.vmem [#allocation1], %s204
    %s206 = sshrl.u32 %s75, 1
    %s207 = sor.u32 %s75, %s206
    %s208 = sand.u32 %s207, 85
    %s209 = sshrl.u32 %s208, 1
    %s210 = sor.u32 %s208, %s209
    %s211 = sand.u32 51, %s210
    %s212 = sshrl.u32 %s211, 2
    %s213 = sor.u32 %s211, %s212
    %s214 = sand.u32 15, %s213
    %v215 = vld [vmem:[%s205] sm:%s214]
    %v216 = vunpack.c.l.bf16 %v215
    %v217 = vunpack.c.h.bf16 %v215
    %s218 = scalar_lea.vmem [#allocation0], 56
    %219 = vst [vmem:[%s218] sm:%s75] %v216
    %s220 = smul.addr 1, 6
    %s221 = scalar_lea.vmem [#allocation1], %s220
    %s222 = sshrl.u32 %s75, 1
    %s223 = sor.u32 %s75, %s222
    %s224 = sand.u32 %s223, 85
    %s225 = sshrl.u32 %s224, 1
    %s226 = sor.u32 %s224, %s225
    %s227 = sand.u32 51, %s226
    %s228 = sshrl.u32 %s227, 2
    %s229 = sor.u32 %s227, %s228
    %s230 = sand.u32 15, %s229
    %v231 = vld [vmem:[%s221] sm:%s230]
    %v232 = vunpack.c.l.bf16 %v231
    %v233 = vunpack.c.h.bf16 %v231
    %s234 = scalar_lea.vmem [#allocation0], 48
    %235 = vst [vmem:[%s234] sm:%s75] %v232
    %s236 = smul.addr 1, 5
    %s237 = scalar_lea.vmem [#allocation1], %s236
    %s238 = sshrl.u32 %s75, 1
    %s239 = sor.u32 %s75, %s238
    %s240 = sand.u32 %s239, 85
    %s241 = sshrl.u32 %s240, 1
    %s242 = sor.u32 %s240, %s241
    %s243 = sand.u32 51, %s242
    %s244 = sshrl.u32 %s243, 2
    %s245 = sor.u32 %s243, %s244
    %s246 = sand.u32 15, %s245
    %v247 = vld [vmem:[%s237] sm:%s246]
    %v248 = vunpack.c.l.bf16 %v247
    %v249 = vunpack.c.h.bf16 %v247
    %s250 = scalar_lea.vmem [#allocation0], 40
    %251 = vst [vmem:[%s250] sm:%s75] %v248
    %s252 = smul.addr 1, 4
    %s253 = scalar_lea.vmem [#allocation1], %s252
    %s254 = sshrl.u32 %s75, 1
    %s255 = sor.u32 %s75, %s254
    %s256 = sand.u32 %s255, 85
    %s257 = sshrl.u32 %s256, 1
    %s258 = sor.u32 %s256, %s257
    %s259 = sand.u32 51, %s258
    %s260 = sshrl.u32 %s259, 2
    %s261 = sor.u32 %s259, %s260
    %s262 = sand.u32 15, %s261
    %v263 = vld [vmem:[%s253] sm:%s262]
    %v264 = vunpack.c.l.bf16 %v263
    %v265 = vunpack.c.h.bf16 %v263
    %s266 = scalar_lea.vmem [#allocation0], 32
    %267 = vst [vmem:[%s266] sm:%s75] %v264
    %s268 = smul.addr 1, 3
    %s269 = scalar_lea.vmem [#allocation1], %s268
    %s270 = sshrl.u32 %s75, 1
    %s271 = sor.u32 %s75, %s270
    %s272 = sand.u32 %s271, 85
    %s273 = sshrl.u32 %s272, 1
    %s274 = sor.u32 %s272, %s273
    %s275 = sand.u32 51, %s274
    %s276 = sshrl.u32 %s275, 2
    %s277 = sor.u32 %s275, %s276
    %s278 = sand.u32 15, %s277
    %v279 = vld [vmem:[%s269] sm:%s278]
    %v280 = vunpack.c.l.bf16 %v279
    %v281 = vunpack.c.h.bf16 %v279
    %s282 = scalar_lea.vmem [#allocation0], 24
    %283 = vst [vmem:[%s282] sm:%s75] %v280
    %s284 = smul.addr 1, 2
    %s285 = scalar_lea.vmem [#allocation1], %s284
    %s286 = sshrl.u32 %s75, 1
    %s287 = sor.u32 %s75, %s286
    %s288 = sand.u32 %s287, 85
    %s289 = sshrl.u32 %s288, 1
    %s290 = sor.u32 %s288, %s289
    %s291 = sand.u32 51, %s290
    %s292 = sshrl.u32 %s291, 2
    %s293 = sor.u32 %s291, %s292
    %s294 = sand.u32 15, %s293
    %v295 = vld [vmem:[%s285] sm:%s294]
    %v296 = vunpack.c.l.bf16 %v295
    %v297 = vunpack.c.h.bf16 %v295
    %s298 = scalar_lea.vmem [#allocation0], 16
    %299 = vst [vmem:[%s298] sm:%s75] %v296
    %s300 = scalar_lea.vmem [#allocation1], 1
    %s301 = sshrl.u32 %s75, 1
    %s302 = sor.u32 %s75, %s301
    %s303 = sand.u32 %s302, 85
    %s304 = sshrl.u32 %s303, 1
    %s305 = sor.u32 %s303, %s304
    %s306 = sand.u32 51, %s305
    %s307 = sshrl.u32 %s306, 2
    %s308 = sor.u32 %s306, %s307
    %s309 = sand.u32 15, %s308
    %v310 = vld [vmem:[%s300] sm:%s309]
    %v311 = vunpack.c.l.bf16 %v310
    %v312 = vunpack.c.h.bf16 %v310
    %s313 = scalar_lea.vmem [#allocation0], 8
    %314 = vst [vmem:[%s313] sm:%s75] %v311
    %s315 = sshrl.u32 %s75, 1
    %s316 = sor.u32 %s75, %s315
    %s317 = sand.u32 %s316, 85
    %s318 = sshrl.u32 %s317, 1
    %s319 = sor.u32 %s317, %s318
    %s320 = sand.u32 51, %s319
    %s321 = sshrl.u32 %s320, 2
    %s322 = sor.u32 %s320, %s321
    %s323 = sand.u32 15, %s322
    %v324 = vld [vmem:[#allocation1] sm:%s323]
    %v325 = vunpack.c.l.bf16 %v324
    %v326 = vunpack.c.h.bf16 %v324
    %327 = vst [vmem:[#allocation0] sm:%s75] %v325
    %s328 = scalar_lea.vmem [#allocation0], 7
    %v329 = vld [vmem:[%s328] ss:$-1 sm:$0xff]
    %v330 = vrot.slane %v329, 6
    %331 = vst [vmem:[#allocation2] sm:$0xff] %v330
    %s332 = scalar_lea.vmem [#allocation0], 8
    %s333 = scalar_lea.vmem %s332, 7 [#allocation0]
    %v334 = vld [vmem:[%s333] ss:$-1 sm:$0xff]
    %v335 = vrot.slane %v334, 6
    %v336 = vlaneseq
    %v337 = vshrl.u32 %v336, 7
    %vm338 = vcmp.lt.s32.totalorder %v337, 2
    %339 = vst.msk [vmem:[#allocation2] sm:$0xff] %vm338, %v335
    %s340 = scalar_lea.vmem [#allocation2], 8
    %s341 = scalar_lea.vmem [#allocation0], 16
    %s342 = scalar_lea.vmem %s341, 7 [#allocation0]
    %v343 = vld [vmem:[%s342] ss:$-1 sm:$0xff]
    %v344 = vrot.slane %v343, 6
    %345 = vst [vmem:[%s340] sm:$0xff] %v344
    %s346 = scalar_lea.vmem %s341, 8 [#allocation0]
    %s347 = scalar_lea.vmem %s346, 7 [#allocation0]
    %v348 = vld [vmem:[%s347] ss:$-1 sm:$0xff]
    %v349 = vrot.slane %v348, 6
    %v350 = vlaneseq
    %v351 = vshrl.u32 %v350, 7
    %vm352 = vcmp.lt.s32.totalorder %v351, 2
    %353 = vst.msk [vmem:[%s340] sm:$0xff] %vm352, %v349
    %s354 = scalar_lea.vmem [#allocation2], 16
    %s355 = scalar_lea.vmem [#allocation0], 32
    %s356 = scalar_lea.vmem %s355, 7 [#allocation0]
    %v357 = vld [vmem:[%s356] ss:$-1 sm:$0xff]
    %v358 = vrot.slane %v357, 6
    %359 = vst [vmem:[%s354] sm:$0xff] %v358
    %s360 = scalar_lea.vmem %s355, 8 [#allocation0]
    %s361 = scalar_lea.vmem %s360, 7 [#allocation0]
    %v362 = vld [vmem:[%s361] ss:$-1 sm:$0xff]
    %v363 = vrot.slane %v362, 6
    %v364 = vlaneseq
    %v365 = vshrl.u32 %v364, 7
    %vm366 = vcmp.lt.s32.totalorder %v365, 2
    %367 = vst.msk [vmem:[%s354] sm:$0xff] %vm366, %v363
    %s368 = scalar_lea.vmem [#allocation2], 24
    %s369 = scalar_lea.vmem [#allocation0], 48
    %s370 = scalar_lea.vmem %s369, 7 [#allocation0]
    %v371 = vld [vmem:[%s370] ss:$-1 sm:$0xff]
    %v372 = vrot.slane %v371, 6
    %373 = vst [vmem:[%s368] sm:$0xff] %v372
    %s374 = scalar_lea.vmem %s369, 8 [#allocation0]
    %s375 = scalar_lea.vmem %s374, 7 [#allocation0]
    %v376 = vld [vmem:[%s375] ss:$-1 sm:$0xff]
    %v377 = vrot.slane %v376, 6
    %v378 = vlaneseq
    %v379 = vshrl.u32 %v378, 7
    %vm380 = vcmp.lt.s32.totalorder %v379, 2
    %381 = vst.msk [vmem:[%s368] sm:$0xff] %vm380, %v377
    %s382 = scalar_lea.vmem [#allocation2], 32
    %s383 = scalar_lea.vmem [#allocation0], 64
    %s384 = scalar_lea.vmem %s383, 7 [#allocation0]
    %v385 = vld [vmem:[%s384] ss:$-1 sm:$0xff]
    %v386 = vrot.slane %v385, 6
    %387 = vst [vmem:[%s382] sm:$0xff] %v386
    %s388 = scalar_lea.vmem %s383, 8 [#allocation0]
    %s389 = scalar_lea.vmem %s388, 7 [#allocation0]
    %v390 = vld [vmem:[%s389] ss:$-1 sm:$0xff]
    %v391 = vrot.slane %v390, 6
    %v392 = vlaneseq
    %v393 = vshrl.u32 %v392, 7
    %vm394 = vcmp.lt.s32.totalorder %v393, 2
    %395 = vst.msk [vmem:[%s382] sm:$0xff] %vm394, %v391
    %s396 = scalar_lea.vmem [#allocation2], 40
    %s397 = scalar_lea.vmem [#allocation0], 80
    %s398 = scalar_lea.vmem %s397, 7 [#allocation0]
    %v399 = vld [vmem:[%s398] ss:$-1 sm:$0xff]
    %v400 = vrot.slane %v399, 6
    %401 = vst [vmem:[%s396] sm:$0xff] %v400
    %s402 = scalar_lea.vmem %s397, 8 [#allocation0]
    %s403 = scalar_lea.vmem %s402, 7 [#allocation0]
    %v404 = vld [vmem:[%s403] ss:$-1 sm:$0xff]
    %v405 = vrot.slane %v404, 6
    %v406 = vlaneseq
    %v407 = vshrl.u32 %v406, 7
    %vm408 = vcmp.lt.s32.totalorder %v407, 2
    %409 = vst.msk [vmem:[%s396] sm:$0xff] %vm408, %v405
    %s410 = scalar_lea.vmem [#allocation2], 48
    %s411 = scalar_lea.vmem [#allocation0], 96
    %s412 = scalar_lea.vmem %s411, 7 [#allocation0]
    %v413 = vld [vmem:[%s412] ss:$-1 sm:$0xff]
    %v414 = vrot.slane %v413, 6
    %415 = vst [vmem:[%s410] sm:$0xff] %v414
    %s416 = scalar_lea.vmem %s411, 8 [#allocation0]
    %s417 = scalar_lea.vmem %s416, 7 [#allocation0]
    %v418 = vld [vmem:[%s417] ss:$-1 sm:$0xff]
    %v419 = vrot.slane %v418, 6
    %v420 = vlaneseq
    %v421 = vshrl.u32 %v420, 7
    %vm422 = vcmp.lt.s32.totalorder %v421, 2
    %423 = vst.msk [vmem:[%s410] sm:$0xff] %vm422, %v419
    %s424 = scalar_lea.vmem [#allocation2], 56
    %s425 = scalar_lea.vmem [#allocation0], 112
    %s426 = scalar_lea.vmem %s425, 7 [#allocation0]
    %v427 = vld [vmem:[%s426] ss:$-1 sm:$0xff]
    %v428 = vrot.slane %v427, 6
    %429 = vst [vmem:[%s424] sm:$0xff] %v428
    %s430 = scalar_lea.vmem %s425, 8 [#allocation0]
    %s431 = scalar_lea.vmem %s430, 7 [#allocation0]
    %v432 = vld [vmem:[%s431] ss:$-1 sm:$0xff]
    %v433 = vrot.slane %v432, 6
    %v434 = vlaneseq
    %v435 = vshrl.u32 %v434, 7
    %vm436 = vcmp.lt.s32.totalorder %v435, 2
    %437 = vst.msk [vmem:[%s424] sm:$0xff] %vm436, %v433
    %s439 = smul.u32 1, 2
    %s440 = sshll.u32 1, %s439
    %s441 = ssub.s32 %s440, 1
    %s442 = sshrl.u32 %s439, 1
    %v443 = vld [vmem:[#allocation2] sm:%s441]
    %v444 = vpack.c.bf16 0.0, %v443
    %s445 = sshll.u32 1, %s442
    %s446 = ssub.s32 %s445, 1
    %447 = vst [vmem:[#allocation3] sm:%s446] %v444
    %s448 = scalar_lea.vmem [#allocation2], 8
    %v449 = vld [vmem:[%s448] sm:%s441]
    %v450 = vpack.c.bf16 0.0, %v449
    %s451 = sshll.u32 1, %s442
    %s452 = ssub.s32 %s451, 1
    %s453 = scalar_lea.vmem [#allocation3], 1
    %454 = vst [vmem:[%s453] sm:%s452] %v450
    %s455 = scalar_lea.vmem [#allocation2], 16
    %v456 = vld [vmem:[%s455] sm:%s441]
    %v457 = vpack.c.bf16 0.0, %v456
    %s458 = sshll.u32 1, %s442
    %s459 = ssub.s32 %s458, 1
    %s460 = smul.addr 1, 2
    %s461 = scalar_lea.vmem [#allocation3], %s460
    %462 = vst [vmem:[%s461] sm:%s459] %v457
    %s463 = scalar_lea.vmem [#allocation2], 24
    %v464 = vld [vmem:[%s463] sm:%s441]
    %v465 = vpack.c.bf16 0.0, %v464
    %s466 = sshll.u32 1, %s442
    %s467 = ssub.s32 %s466, 1
    %s468 = smul.addr 1, 3
    %s469 = scalar_lea.vmem [#allocation3], %s468
    %470 = vst [vmem:[%s469] sm:%s467] %v465
    %s471 = scalar_lea.vmem [#allocation2], 32
    %v472 = vld [vmem:[%s471] sm:%s441]
    %v473 = vpack.c.bf16 0.0, %v472
    %s474 = sshll.u32 1, %s442
    %s475 = ssub.s32 %s474, 1
    %s476 = smul.addr 1, 4
    %s477 = scalar_lea.vmem [#allocation3], %s476
    %478 = vst [vmem:[%s477] sm:%s475] %v473
    %s479 = scalar_lea.vmem [#allocation2], 40
    %v480 = vld [vmem:[%s479] sm:%s441]
    %v481 = vpack.c.bf16 0.0, %v480
    %s482 = sshll.u32 1, %s442
    %s483 = ssub.s32 %s482, 1
    %s484 = smul.addr 1, 5
    %s485 = scalar_lea.vmem [#allocation3], %s484
    %486 = vst [vmem:[%s485] sm:%s483] %v481
    %s487 = scalar_lea.vmem [#allocation2], 48
    %v488 = vld [vmem:[%s487] sm:%s441]
    %v489 = vpack.c.bf16 0.0, %v488
    %s490 = sshll.u32 1, %s442
    %s491 = ssub.s32 %s490, 1
    %s492 = smul.addr 1, 6
    %s493 = scalar_lea.vmem [#allocation3], %s492
    %494 = vst [vmem:[%s493] sm:%s491] %v489
    %s495 = scalar_lea.vmem [#allocation2], 56
    %v496 = vld [vmem:[%s495] sm:%s441]
    %v497 = vpack.c.bf16 0.0, %v496
    %s498 = sshll.u32 1, %s442
    %s499 = ssub.s32 %s498, 1
    %s500 = smul.addr 1, 7
    %s501 = scalar_lea.vmem [#allocation3], %s500
    %502 = vst [vmem:[%s501] sm:%s499] %v497
    // Predicated region
    $region39: #{reverse} parent=1 // pred_check
      _
    $region40: #{reverse} parent=1 // pred_check_branch
      %504 = sbr.rel (0) target = $region42
    $region41: #{reverse} parent=1 // pred_region
      // Predicated region
      $region43: #{reverse} parent=41 // pred_check
        _
      $region44: #{reverse} parent=41 // pred_check_branch
        %506 = sbr.rel (0) target = $region46
      $region45: #{reverse} parent=41 // pred_region
        // Predicated region
        $region58: #{reverse} parent=45 // pred_check
          _
        $region59: #{reverse} parent=45 // pred_check_branch
          %522 = sbr.rel (0) target = $region61
        $region60: #{reverse} parent=45 // pred_region
          loop: start=0, step=1, limit=1
          $region62: #{reverse} parent=60 // loop_pre_header
            _
          $region63: #{reverse} parent=60 // loop_header
            %s524 = sphi 0, %s528
            %p525 = scmp.ge.s32.totalorder %s524, 1
            %s529 = sphi [#allocation3], [#allocation3]
            %s530 = sphi %s1, %s1
          $region64: #{reverse} parent=60 // loop_header_branch
            %527 = sbr.rel (%p525) target = $region68
          $region65: #{reverse} parent=60 // loop_body
            %v531 = vld [vmem:[%s529] sm:$0xff]
            %532 = vst [vmem:[%s530] sm:$0xff] %v531
          $region66: #{reverse} parent=60 // loop_footer
            %s528 = sadd.s32 1, %s524
          $region67: #{reverse} parent=60 // loop_footer_branch
            %523 = sbr.rel target = $region63
          $region68: #{reverse} parent=60 // loop_exit
            _
        $region61: #{reverse} parent=45 // pred_fallthru
          _
        // Predicated region
        $region69: #{reverse} parent=45 // pred_check
          _
        $region70: #{reverse} parent=45 // pred_check_branch
          %534 = sbr.rel target = $region72
        $region71: #{reverse} parent=45 // pred_region
          _
        $region72: #{reverse} parent=45 // pred_fallthru
          _
      $region46: #{reverse} parent=41 // pred_fallthru
        _
      // Predicated region
      $region47: #{reverse} parent=41 // pred_check
        _
      $region48: #{reverse} parent=41 // pred_check_branch
        %508 = sbr.rel target = $region50
      $region49: #{reverse} parent=41 // pred_region
        %s510 = ssub.s32 256, 1
        loop: start=0, step=1, limit=1
        $region51: #{reverse} parent=49 // loop_pre_header
          _
        $region52: #{reverse} parent=49 // loop_header
          %s512 = sphi 0, %s516
          %p513 = scmp.ge.s32.totalorder %s512, 1
          %s517 = sphi [#allocation3], [#allocation3]
          %s518 = sphi %s1, %s1
        $region53: #{reverse} parent=49 // loop_header_branch
          %515 = sbr.rel (%p513) target = $region57
        $region54: #{reverse} parent=49 // loop_body
          %v519 = vld [vmem:[%s517] sm:%s510]
          %520 = vst [vmem:[%s518] sm:%s510] %v519
        $region55: #{reverse} parent=49 // loop_footer
          %s516 = sadd.s32 1, %s512
        $region56: #{reverse} parent=49 // loop_footer_branch
          %511 = sbr.rel target = $region52
        $region57: #{reverse} parent=49 // loop_exit
          _
      $region50: #{reverse} parent=41 // pred_fallthru
        _
    $region42: #{reverse} parent=1 // pred_fallthru
      _
    %535 = vnop

// kernel: sphere_conv3_forward.1
$region0: #{sphere_conv3_forward.1}
  #allocation0 [shape = 'u32[]', space=smem, size = 0x4, offset = 0x4, fixed_abs, tag = 'smem constant byte address 0x4 - core index']
  #allocation1 [shape = 'u32[144,128]{1,0:T(1,128)}', space=vmem, size = 0x12000, scoped, tag = 'internal scratch']
  %s0 = inlined_call_operand.vmem [shape: bf16[1024,36], index: 0, kind: input, shape index: {}]
  %s1 = inlined_call_operand.vmem [shape: bf16[36,128], index: 1, kind: input, shape index: {}]
  %s2 = inlined_call_operand.vmem [shape: f32[1,128], index: 2, kind: input, shape index: {}]
  %s3 = inlined_call_operand.vmem [shape: f32[1024,128], index: 3, kind: output, shape index: {}]
  %s4 = sld [smem:[#allocation0]]
  $region45: #{sphere_conv3_forward.1} parent=0
    _
  %s6 = ssub.s32 1, %s4
  %s7 = scalar_select 0, %s6, %s4
  loop: start=0, step=1, limit=6
  $region2: #{sphere_conv3_forward.1} parent=0 // loop_pre_header
    _
  $region3: #{sphere_conv3_forward.1} parent=0 // loop_header
    %s9 = sphi 0, %s13
    %p10 = scmp.ge.s32.totalorder %s9, 6
    %s16 = sphi 0, %s28
    %s17 = sphi 0, %s24
    %s18 = sphi 0, %s16
    %s19 = sphi 0, %s17
    %s20 = sphi 0, %s18
    %s21 = sphi 0, %s19
    %s31 = sphi 0, %s33
    %s34 = sphi 0, %s31
    %s35 = sphi 0, %s34
    %s51 = sphi 0, %s35
    %s57 = sphi 0, %s59
    %s60 = sphi 0, %s57
    %s61 = sphi 0, %s60
    %s77 = sphi 0, %s61
    %s83 = sphi 0, %s85
    %s86 = sphi 0, %s83
    %s87 = sphi 0, %s86
    %s103 = sphi 0, %s87
    %s111 = sphi 0, %s113
    %s114 = sphi 0, %s111
    %s115 = sphi 0, %s114
    %s131 = sphi 0, %s115
  $region4: #{sphere_conv3_forward.1} parent=0 // loop_header_branch
    %12 = sbr.rel (%p10) target = $region8
  $region5: #{sphere_conv3_forward.1} parent=0 // loop_body
    %s14 = ssub.s32 %s9, 1
    %s15 = ssub.s32 %s9, 2
    %s22 = sadd.s32 1, %s17
    %p23 = scmp.ge.s32.totalorder %s22, 1
    %s24 = scalar_select %p23, 0, %s22
    %s25 = sadd.s32 1, %s16
    %s26 = scalar_select %p23, %s25, %s16
    %p27 = scmp.ge.s32.totalorder %s26, 4
    %s28 = scalar_select %p27, 0, %s26
    %s29 = ssub.s32 %s16, %s28
    %p30 = scmp.eq.s32.totalorder %s29, 0
    %s32 = sadd.s32 %s31, 1
    %s33 = scalar_select %p30, %s31, %s32
    %p36 = pneg %p30
    %p37 = scmp.eq.s32.totalorder %s9, 3
    %p38 = por %p36, %p37
    %p39 = scmp.ne.s32.totalorder %s31, %s34
    %p40 = scmp.eq.s32.totalorder %s9, 0
    %p41 = por %p39, %p40
    %p42 = scmp.ne.s32.totalorder %s31, %s34
    %p43 = scmp.eq.s32.totalorder %s14, 3
    %p44 = por %p42, %p43
    %p45 = scmp.ne.s32.totalorder %s34, %s35
    %p46 = scmp.eq.s32.totalorder %s14, 0
    %p47 = por %p45, %p46
    %p48 = scmp.ne.s32.totalorder %s34, %s35
    %p49 = scmp.eq.s32.totalorder %s15, 3
    %p50 = por %p48, %p49
    %p52 = scmp.ne.s32.totalorder %s35, %s51
    %p53 = scmp.eq.s32.totalorder %s15, 0
    %p54 = por %p52, %p53
    %s55 = ssub.s32 %s17, %s24
    %p56 = scmp.eq.s32.totalorder %s55, 0
    %s58 = sadd.s32 %s57, 1
    %s59 = scalar_select %p56, %s57, %s58
    %p62 = pneg %p56
    %p63 = scmp.eq.s32.totalorder %s9, 3
    %p64 = por %p62, %p63
    %p65 = scmp.ne.s32.totalorder %s57, %s60
    %p66 = scmp.eq.s32.totalorder %s9, 0
    %p67 = por %p65, %p66
    %p68 = scmp.ne.s32.totalorder %s57, %s60
    %p69 = scmp.eq.s32.totalorder %s14, 3
    %p70 = por %p68, %p69
    %p71 = scmp.ne.s32.totalorder %s60, %s61
    %p72 = scmp.eq.s32.totalorder %s14, 0
    %p73 = por %p71, %p72
    %p74 = scmp.ne.s32.totalorder %s60, %s61
    %p75 = scmp.eq.s32.totalorder %s15, 3
    %p76 = por %p74, %p75
    %p78 = scmp.ne.s32.totalorder %s61, %s77
    %p79 = scmp.eq.s32.totalorder %s15, 0
    %p80 = por %p78, %p79
    %s81 = ssub.s32 %s17, %s24
    %p82 = scmp.eq.s32.totalorder %s81, 0
    %s84 = sadd.s32 %s83, 1
    %s85 = scalar_select %p82, %s83, %s84
    %p88 = pneg %p82
    %p89 = scmp.eq.s32.totalorder %s9, 3
    %p90 = por %p88, %p89
    %p91 = scmp.ne.s32.totalorder %s83, %s86
    %p92 = scmp.eq.s32.totalorder %s9, 0
    %p93 = por %p91, %p92
    %p94 = scmp.ne.s32.totalorder %s83, %s86
    %p95 = scmp.eq.s32.totalorder %s14, 3
    %p96 = por %p94, %p95
    %p97 = scmp.ne.s32.totalorder %s86, %s87
    %p98 = scmp.eq.s32.totalorder %s14, 0
    %p99 = por %p97, %p98
    %p100 = scmp.ne.s32.totalorder %s86, %s87
    %p101 = scmp.eq.s32.totalorder %s15, 3
    %p102 = por %p100, %p101
    %p104 = scmp.ne.s32.totalorder %s87, %s103
    %p105 = scmp.eq.s32.totalorder %s15, 0
    %p106 = por %p104, %p105
    %s107 = ssub.s32 %s16, %s28
    %s108 = ssub.s32 %s17, %s24
    %s109 = sor.u32 %s107, %s108
    %p110 = scmp.eq.s32.totalorder %s109, 0
    %s112 = sadd.s32 %s111, 1
    %s113 = scalar_select %p110, %s111, %s112
    %p116 = pneg %p110
    %p117 = scmp.eq.s32.totalorder %s9, 3
    %p118 = por %p116, %p117
    %p119 = scmp.ne.s32.totalorder %s111, %s114
    %p120 = scmp.eq.s32.totalorder %s9, 0
    %p121 = por %p119, %p120
    %p122 = scmp.ne.s32.totalorder %s111, %s114
    %p123 = scmp.eq.s32.totalorder %s14, 3
    %p124 = por %p122, %p123
    %p125 = scmp.ne.s32.totalorder %s114, %s115
    %p126 = scmp.eq.s32.totalorder %s14, 0
    %p127 = por %p125, %p126
    %p128 = scmp.ne.s32.totalorder %s114, %s115
    %p129 = scmp.eq.s32.totalorder %s15, 3
    %p130 = por %p128, %p129
    %p132 = scmp.ne.s32.totalorder %s115, %s131
    %p133 = scmp.eq.s32.totalorder %s15, 0
    %p134 = por %p132, %p133
    %p135 = scmp.le.s32.totalorder 1, %s9
    %p136 = scmp.lt.s32.totalorder %s9, 5
    %p137 = pnand %p135, %p136
    %p138 = pneg %p137
    // Predicated region
    $region9: #{sphere_conv3_forward.1} parent=5 // pred_check
      _
    $region10: #{sphere_conv3_forward.1} parent=5 // pred_check_branch
      %140 = sbr.rel (%p137) target = $region12
    $region11: #{sphere_conv3_forward.1} parent=5 // pred_region
      %s141 = ssub.s32 %s9, 1
      // Predicated region
      $region13: #{sphere_conv3_forward.1} parent=11 // pred_check
        %p142 = pneg %p73
      $region14: #{sphere_conv3_forward.1} parent=11 // pred_check_branch
        %144 = sbr.rel (%p142) target = $region16
      $region15: #{sphere_conv3_forward.1} parent=11 // pred_region
        %p145 = scmp.lt.s32.totalorder %s19, 0
        %s146 = scalar_select %p145, %s19, 0
        %s147 = smul.addr %s146, 4
        %s148 = scalar_lea.vmem %s1, %s147
      $region16: #{sphere_conv3_forward.1} parent=11 // pred_fallthru
        _
      // Predicated region
      $region17: #{sphere_conv3_forward.1} parent=11 // pred_check
        %p149 = pneg %p99
      $region18: #{sphere_conv3_forward.1} parent=11 // pred_check_branch
        %151 = sbr.rel (%p149) target = $region20
      $region19: #{sphere_conv3_forward.1} parent=11 // pred_region
        %p152 = scmp.lt.s32.totalorder %s19, 0
        %s153 = scalar_select %p152, %s19, 0
        %s154 = scalar_lea.vmem %s2, %s153
      $region20: #{sphere_conv3_forward.1} parent=11 // pred_fallthru
        _
    $region12: #{sphere_conv3_forward.1} parent=5 // pred_fallthru
      _
    %p155 = scmp.lt.s32.totalorder %s9, 4
    // Predicated region
    $region21: #{sphere_conv3_forward.1} parent=5 // pred_check
      %p156 = pneg %p155
    $region22: #{sphere_conv3_forward.1} parent=5 // pred_check_branch
      %158 = sbr.rel (%p156) target = $region24
    $region23: #{sphere_conv3_forward.1} parent=5 // pred_region
      // Predicated region
      $region25: #{sphere_conv3_forward.1} parent=23 // pred_check
        %p159 = pneg %p41
      $region26: #{sphere_conv3_forward.1} parent=23 // pred_check_branch
        %161 = sbr.rel (%p159) target = $region28
      $region27: #{sphere_conv3_forward.1} parent=23 // pred_region
        %s162 = smul.u32 32, %s16
        %p163 = scmp.lt.s32.totalorder %s162, 127
        %s164 = scalar_select %p163, %s162, 127
        %s165 = smul.addr %s164, 4
        %s166 = scalar_lea.vmem %s0, %s165
        %s167 = smul.u32 32, %s16
      $region28: #{sphere_conv3_forward.1} parent=23 // pred_fallthru
        _
    $region24: #{sphere_conv3_forward.1} parent=5 // pred_fallthru
      _
    %p168 = scmp.le.s32.totalorder 1, %s9
    %p169 = scmp.lt.s32.totalorder %s9, 5
    %p170 = pnand %p168, %p169
    %p171 = pneg %p170
    // Predicated region
    $region29: #{sphere_conv3_forward.1} parent=5 // pred_check
      _
    $region30: #{sphere_conv3_forward.1} parent=5 // pred_check_branch
      %173 = sbr.rel (%p170) target = $region32
    $region31: #{sphere_conv3_forward.1} parent=5 // pred_region
      %s174 = ssub.s32 %s9, 1
      %s175 = smul.u32 32, %s18
      %p176 = scmp.lt.s32.totalorder %s175, 127
      %s177 = scalar_select %p176, %s175, 127
      %s178 = smul.addr %s177, 4
      %s179 = scalar_lea.vmem %s0, %s178
      %p180 = pneg %p47
      %p181 = pneg %p44
      %p182 = scmp.lt.s32.totalorder %s19, 0
      %s183 = scalar_select %p182, %s19, 0
      %s184 = smul.addr %s183, 4
      %s185 = scalar_lea.vmem %s1, %s184
      %p186 = pneg %p73
      %p187 = pneg %p70
      %p188 = scmp.lt.s32.totalorder %s19, 0
      %s189 = scalar_select %p188, %s19, 0
      %s190 = scalar_lea.vmem %s2, %s189
      %p191 = pneg %p99
      %p192 = pneg %p96
      %p193 = pneg %p127
      %p194 = pneg %p124
      %s195 = smul.u32 32, %s18
      %p196 = scmp.lt.s32.totalorder %s195, 127
      %s197 = scalar_select %p196, %s195, 127
      %p198 = scmp.lt.s32.totalorder %s19, 0
      %s199 = scalar_select %p198, %s19, 0
      %s200 = sadd.s32 %s199, %s197
      %s201 = smul.addr %s200, 8
      %s202 = scalar_lea.vmem %s3, %s201
      %s203 = smul.u32 32, %s18
      %p204 = scmp.lt.s32.totalorder %s203, 127
      %s205 = scalar_select %p204, %s203, 127
      %s206 = smul.addr %s205, 4
      %s207 = scalar_lea.vmem %s0, %s206
      %s208 = smul.u32 32, %s18
      %p209 = scmp.lt.s32.totalorder %s19, 0
      %s210 = scalar_select %p209, %s19, 0
      %s211 = smul.addr %s210, 4
      %s212 = scalar_lea.vmem %s1, %s211
      %p213 = scmp.lt.s32.totalorder %s19, 0
      %s214 = scalar_select %p213, %s19, 0
      %s215 = scalar_lea.vmem %s2, %s214
      %s216 = smul.u32 32, %s18
      %p217 = scmp.lt.s32.totalorder %s216, 127
      %s218 = scalar_select %p217, %s216, 127
      %p219 = scmp.lt.s32.totalorder %s19, 0
      %s220 = scalar_select %p219, %s19, 0
      %s221 = sadd.s32 %s220, %s218
      %s222 = smul.addr %s221, 8
      %s223 = scalar_lea.vmem %s3, %s222
      %s224 = smul.u32 32, %s18
      %v226 = vld [vmem:[%s207] sm:$0xf]
      %v227 = vld [vmem:[%s207 + $0x4] sm:$0xf]
      %v228 = vld [vmem:[%s207 + $0x8] sm:$0xf]
      %v229 = vld [vmem:[%s207 + $0xc] sm:$0xf]
      %v230 = vld [vmem:[%s207 + $0x10] sm:$0xf]
      %v231 = vld [vmem:[%s207 + $0x14] sm:$0xf]
      %v232 = vld [vmem:[%s207 + $0x18] sm:$0xf]
      %v233 = vld [vmem:[%s207 + $0x1c] sm:$0xf]
      %v234 = vld [vmem:[%s207 + $0x20] sm:$0xf]
      %v235 = vld [vmem:[%s207 + $0x24] sm:$0xf]
      %v236 = vld [vmem:[%s207 + $0x28] sm:$0xf]
      %v237 = vld [vmem:[%s207 + $0x2c] sm:$0xf]
      %v238 = vld [vmem:[%s207 + $0x30] sm:$0xf]
      %v239 = vld [vmem:[%s207 + $0x34] sm:$0xf]
      %v240 = vld [vmem:[%s207 + $0x38] sm:$0xf]
      %v241 = vld [vmem:[%s207 + $0x3c] sm:$0xf]
      %v242 = vld [vmem:[%s207 + $0x40] sm:$0xf]
      %v243 = vld [vmem:[%s207 + $0x44] sm:$0xf]
      %v244 = vld [vmem:[%s207 + $0x48] sm:$0xf]
      %v245 = vld [vmem:[%s207 + $0x4c] sm:$0xf]
      %v246 = vld [vmem:[%s207 + $0x50] sm:$0xf]
      %v247 = vld [vmem:[%s207 + $0x54] sm:$0xf]
      %v248 = vld [vmem:[%s207 + $0x58] sm:$0xf]
      %v249 = vld [vmem:[%s207 + $0x5c] sm:$0xf]
      %v250 = vld [vmem:[%s207 + $0x60] sm:$0xf]
      %v251 = vld [vmem:[%s207 + $0x64] sm:$0xf]
      %v252 = vld [vmem:[%s207 + $0x68] sm:$0xf]
      %v253 = vld [vmem:[%s207 + $0x6c] sm:$0xf]
      %v254 = vld [vmem:[%s207 + $0x70] sm:$0xf]
      %v255 = vld [vmem:[%s207 + $0x74] sm:$0xf]
      %v256 = vld [vmem:[%s207 + $0x78] sm:$0xf]
      %v257 = vld [vmem:[%s207 + $0x7c] sm:$0xf]
      %v258 = vld [vmem:[%s212] sm:$0xf]
      %v259 = vld [vmem:[%s212 + $0x4] sm:$0xf]
      %v260 = vld [vmem:[%s212 + $0x8] sm:$0xf]
      %v261 = vld [vmem:[%s212 + $0xc] sm:$0xf]
      %v262 = vld [vmem:[%s212 + $0x10] sm:$0x3]
      %v263 = vld [vmem:[%s215] sm:$0x1]
      %v265 = vlaneseq
      %v266 = vshrl.u32 %v265, 7
      %v267 = vsub.s32 0, %v266
      %v268 = vrot.slane %v263, %v267
      %v302 = vunpack.c.l.b16 %v226
      %v303 = vunpack.c.l.b16 %v227
      %v304 = vunpack.c.l.b16 %v228
      %v305 = vunpack.c.l.b16 %v229
      %v306 = vunpack.c.l.b16 %v230
      %v307 = vunpack.c.l.b16 %v231
      %v308 = vunpack.c.l.b16 %v232
      %v309 = vunpack.c.l.b16 %v233
      %v310 = vunpack.c.l.b16 %v234
      %v311 = vunpack.c.l.b16 %v235
      %v312 = vunpack.c.l.b16 %v236
      %v313 = vunpack.c.l.b16 %v237
      %v314 = vunpack.c.l.b16 %v238
      %v315 = vunpack.c.l.b16 %v239
      %v316 = vunpack.c.l.b16 %v240
      %v317 = vunpack.c.l.b16 %v241
      %v318 = vunpack.c.l.b16 %v242
      %v319 = vunpack.c.l.b16 %v243
      %v320 = vunpack.c.l.b16 %v244
      %v321 = vunpack.c.l.b16 %v245
      %v322 = vunpack.c.l.b16 %v246
      %v323 = vunpack.c.l.b16 %v247
      %v324 = vunpack.c.l.b16 %v248
      %v325 = vunpack.c.l.b16 %v249
      %v326 = vunpack.c.l.b16 %v250
      %v327 = vunpack.c.l.b16 %v251
      %v328 = vunpack.c.l.b16 %v252
      %v329 = vunpack.c.l.b16 %v253
      %v330 = vunpack.c.l.b16 %v254
      %v331 = vunpack.c.l.b16 %v255
      %v332 = vunpack.c.l.b16 %v256
      %v333 = vunpack.c.l.b16 %v257
      %v334 = vpack.c.b16 %v303, %v302
      %v335 = vpack.c.b16 %v305, %v304
      %v336 = vpack.c.b16 %v307, %v306
      %v337 = vpack.c.b16 %v309, %v308
      %v338 = vpack.c.b16 %v311, %v310
      %v339 = vpack.c.b16 %v313, %v312
      %v340 = vpack.c.b16 %v315, %v314
      %v341 = vpack.c.b16 %v317, %v316
      %v342 = vpack.c.b16 %v319, %v318
      %v343 = vpack.c.b16 %v321, %v320
      %v344 = vpack.c.b16 %v323, %v322
      %v345 = vpack.c.b16 %v325, %v324
      %v346 = vpack.c.b16 %v327, %v326
      %v347 = vpack.c.b16 %v329, %v328
      %v348 = vpack.c.b16 %v331, %v330
      %v349 = vpack.c.b16 %v333, %v332
      %v355 = vunpack.c.l.b16 %v258
      %v356 = vunpack.c.l.b16 %v259
      %v357 = vunpack.c.l.b16 %v260
      %v358 = vunpack.c.l.b16 %v261
      %v359 = vunpack.c.l.b16 %v262
      %v360 = vpack.c.b16 %v356, %v355
      %v361 = vpack.c.b16 %v358, %v357
      %v362 = vpack.c.b16 %v359, %v359
      %vm365 = vcmask 293888
      %v367 = vsel %vm365, %v334, 0
      %v370 = vsel %vm365, %v335, 0
      %v373 = vsel %vm365, %v336, 0
      %v376 = vsel %vm365, %v337, 0
      %v379 = vsel %vm365, %v338, 0
      %v382 = vsel %vm365, %v339, 0
      %v385 = vsel %vm365, %v340, 0
      %v388 = vsel %vm365, %v341, 0
      %v391 = vsel %vm365, %v342, 0
      %v394 = vsel %vm365, %v343, 0
      %v397 = vsel %vm365, %v344, 0
      %v400 = vsel %vm365, %v345, 0
      %v403 = vsel %vm365, %v346, 0
      %v406 = vsel %vm365, %v347, 0
      %v409 = vsel %vm365, %v348, 0
      %v412 = vsel %vm365, %v349, 0
      %vm414 = vcmask 1041408
      %v416 = vsel %vm414, %v362, 0
      %418 = vmatprep.subr.bf16.mxu0 0
      %419 = vmatpush1.bf16.msra.mxu0 0
      %420 = vmatprep.subr.bf16.mxu0 0
      %421 = vmatpush1.bf16.msra.mxu0 0
      %422 = vmatprep.subr.bf16.mxu0 0
      %423 = vmatpush1.bf16.msra.mxu0 0
      %424 = vmatprep.subr.bf16.mxu0 0
      %425 = vmatpush1.bf16.msra.mxu0 0
      %426 = vmatprep.subr.bf16.mxu0 0
      %427 = vmatpush1.bf16.msra.mxu0 0
      %428 = vmatprep.subr.bf16.mxu0 0
      %429 = vmatpush1.bf16.msra.mxu0 %v416
      %430 = vmatprep.subr.bf16.mxu0 0
      %431 = vmatpush1.bf16.msra.mxu0 %v361
      %432 = vmatprep.subr.bf16.mxu0 0
      %433 = vmatpush1.bf16.msra.mxu0 %v360
      %434 = vmatprep.subr.bf16.mxu0 0
      %435 = vmatpush2.bf16.msra.mxu0 0
      %436 = vmatprep.subr.bf16.mxu0 0
      %437 = vmatpush2.bf16.msra.mxu0 0
      %438 = vmatprep.subr.bf16.mxu0 0
      %439 = vmatpush2.bf16.msra.mxu0 0
      %440 = vmatprep.subr.bf16.mxu0 0
      %441 = vmatpush2.bf16.msra.mxu0 0
      %442 = vmatprep.subr.bf16.mxu0 0
      %443 = vmatpush2.bf16.msra.mxu0 0
      %444 = vmatprep.subr.bf16.mxu0 0
      %445 = vmatpush2.bf16.msra.mxu0 0
      %446 = vmatprep.subr.bf16.mxu0 0
      %447 = vmatpush2.bf16.msra.mxu0 0
      %448 = vmatprep.subr.bf16.mxu0 0
      %449 = vmatpush2.bf16.msra.mxu0 0
      %450 = vmatprep.mubr.bf16.mxu0 0
      %451 = vmatmul.mubr.bf16.gmra.mxu0 %v367
      %v452 = vpop.f32.mrf.mxu0
      %v453 = vadd.f32 %v268, %v452
      %v454 = vpop.f32.mrf.mxu0
      %v455 = vpop.f32.mrf.mxu0
      %v456 = vadd.f32 %v268, %v455
      %v457 = vpop.f32.mrf.mxu0
      %458 = vmatprep.mubr.bf16.mxu0 0
      %459 = vmatmul.mubr.bf16.gmra.mxu0 %v370
      %v460 = vpop.f32.mrf.mxu0
      %v461 = vadd.f32 %v268, %v460
      %v462 = vpop.f32.mrf.mxu0
      %v463 = vpop.f32.mrf.mxu0
      %v464 = vadd.f32 %v268, %v463
      %v465 = vpop.f32.mrf.mxu0
      %466 = vmatprep.mubr.bf16.mxu0 0
      %467 = vmatmul.mubr.bf16.gmra.mxu0 %v373
      %v468 = vpop.f32.mrf.mxu0
      %v469 = vadd.f32 %v268, %v468
      %v470 = vpop.f32.mrf.mxu0
      %v471 = vpop.f32.mrf.mxu0
      %v472 = vadd.f32 %v268, %v471
      %v473 = vpop.f32.mrf.mxu0
      %474 = vmatprep.mubr.bf16.mxu0 0
      %475 = vmatmul.mubr.bf16.gmra.mxu0 %v376
      %v476 = vpop.f32.mrf.mxu0
      %v477 = vadd.f32 %v268, %v476
      %v478 = vpop.f32.mrf.mxu0
      %v479 = vpop.f32.mrf.mxu0
      %v480 = vadd.f32 %v268, %v479
      %v481 = vpop.f32.mrf.mxu0
      %482 = vmatprep.mubr.bf16.mxu0 0
      %483 = vmatmul.mubr.bf16.gmra.mxu0 %v379
      %v484 = vpop.f32.mrf.mxu0
      %v485 = vadd.f32 %v268, %v484
      %v486 = vpop.f32.mrf.mxu0
      %v487 = vpop.f32.mrf.mxu0
      %v488 = vadd.f32 %v268, %v487
      %v489 = vpop.f32.mrf.mxu0
      %490 = vmatprep.mubr.bf16.mxu0 0
      %491 = vmatmul.mubr.bf16.gmra.mxu0 %v382
      %v492 = vpop.f32.mrf.mxu0
      %v493 = vadd.f32 %v268, %v492
      %v494 = vpop.f32.mrf.mxu0
      %v495 = vpop.f32.mrf.mxu0
      %v496 = vadd.f32 %v268, %v495
      %v497 = vpop.f32.mrf.mxu0
      %498 = vmatprep.mubr.bf16.mxu0 0
      %499 = vmatmul.mubr.bf16.gmra.mxu0 %v385
      %v500 = vpop.f32.mrf.mxu0
      %v501 = vadd.f32 %v268, %v500
      %v502 = vpop.f32.mrf.mxu0
      %v503 = vpop.f32.mrf.mxu0
      %v504 = vadd.f32 %v268, %v503
      %v505 = vpop.f32.mrf.mxu0
      %506 = vmatprep.mubr.bf16.mxu0 0
      %507 = vmatmul.mubr.bf16.gmra.mxu0 %v388
      %v508 = vpop.f32.mrf.mxu0
      %v509 = vadd.f32 %v268, %v508
      %v510 = vpop.f32.mrf.mxu0
      %v511 = vpop.f32.mrf.mxu0
      %v512 = vadd.f32 %v268, %v511
      %v513 = vpop.f32.mrf.mxu0
      %514 = vmatprep.mubr.bf16.mxu0 0
      %515 = vmatmul.mubr.bf16.gmra.mxu0 %v391
      %v516 = vpop.f32.mrf.mxu0
      %v517 = vadd.f32 %v268, %v516
      %v518 = vpop.f32.mrf.mxu0
      %v519 = vpop.f32.mrf.mxu0
      %v520 = vadd.f32 %v268, %v519
      %v521 = vpop.f32.mrf.mxu0
      %522 = vmatprep.mubr.bf16.mxu0 0
      %523 = vmatmul.mubr.bf16.gmra.mxu0 %v394
      %v524 = vpop.f32.mrf.mxu0
      %v525 = vadd.f32 %v268, %v524
      %v526 = vpop.f32.mrf.mxu0
      %v527 = vpop.f32.mrf.mxu0
      %v528 = vadd.f32 %v268, %v527
      %v529 = vpop.f32.mrf.mxu0
      %530 = vmatprep.mubr.bf16.mxu0 0
      %531 = vmatmul.mubr.bf16.gmra.mxu0 %v397
      %v532 = vpop.f32.mrf.mxu0
      %v533 = vadd.f32 %v268, %v532
      %v534 = vpop.f32.mrf.mxu0
      %v535 = vpop.f32.mrf.mxu0
      %v536 = vadd.f32 %v268, %v535
      %v537 = vpop.f32.mrf.mxu0
      %538 = vmatprep.mubr.bf16.mxu0 0
      %539 = vmatmul.mubr.bf16.gmra.mxu0 %v400
      %v540 = vpop.f32.mrf.mxu0
      %v541 = vadd.f32 %v268, %v540
      %v542 = vpop.f32.mrf.mxu0
      %v543 = vpop.f32.mrf.mxu0
      %v544 = vadd.f32 %v268, %v543
      %v545 = vpop.f32.mrf.mxu0
      %546 = vmatprep.mubr.bf16.mxu0 0
      %547 = vmatmul.mubr.bf16.gmra.mxu0 %v403
      %v548 = vpop.f32.mrf.mxu0
      %v549 = vadd.f32 %v268, %v548
      %v550 = vpop.f32.mrf.mxu0
      %v551 = vpop.f32.mrf.mxu0
      %v552 = vadd.f32 %v268, %v551
      %v553 = vpop.f32.mrf.mxu0
      %554 = vmatprep.mubr.bf16.mxu0 0
      %555 = vmatmul.mubr.bf16.gmra.mxu0 %v406
      %v556 = vpop.f32.mrf.mxu0
      %v557 = vadd.f32 %v268, %v556
      %v558 = vpop.f32.mrf.mxu0
      %v559 = vpop.f32.mrf.mxu0
      %v560 = vadd.f32 %v268, %v559
      %v561 = vpop.f32.mrf.mxu0
      %562 = vmatprep.mubr.bf16.mxu0 0
      %563 = vmatmul.mubr.bf16.gmra.mxu0 %v409
      %v564 = vpop.f32.mrf.mxu0
      %v565 = vadd.f32 %v268, %v564
      %v566 = vpop.f32.mrf.mxu0
      %v567 = vpop.f32.mrf.mxu0
      %v568 = vadd.f32 %v268, %v567
      %v569 = vpop.f32.mrf.mxu0
      %570 = vmatprep.mubr.bf16.mxu0 0
      %571 = vmatmul.mubr.bf16.gmra.mxu0 %v412
      %v572 = vpop.f32.mrf.mxu0
      %v573 = vadd.f32 %v268, %v572
      %v574 = vpop.f32.mrf.mxu0
      %v575 = vpop.f32.mrf.mxu0
      %v576 = vadd.f32 %v268, %v575
      %v577 = vpop.f32.mrf.mxu0
      %578 = vdwg.mxu0
      %579 = vst [vmem:[%s223] sm:$0xff] %v453
      %580 = vst [vmem:[%s223 + $0x8] sm:$0xff] %v456
      %581 = vst [vmem:[%s223 + $0x10] sm:$0xff] %v461
      %582 = vst [vmem:[%s223 + $0x18] sm:$0xff] %v464
      %583 = vst [vmem:[%s223 + $0x20] sm:$0xff] %v469
      %584 = vst [vmem:[%s223 + $0x28] sm:$0xff] %v472
      %585 = vst [vmem:[%s223 + $0x30] sm:$0xff] %v477
      %586 = vst [vmem:[%s223 + $0x38] sm:$0xff] %v480
      %587 = vst [vmem:[%s223 + $0x40] sm:$0xff] %v485
      %588 = vst [vmem:[%s223 + $0x48] sm:$0xff] %v488
      %589 = vst [vmem:[%s223 + $0x50] sm:$0xff] %v493
      %590 = vst [vmem:[%s223 + $0x58] sm:$0xff] %v496
      %591 = vst [vmem:[%s223 + $0x60] sm:$0xff] %v501
      %592 = vst [vmem:[%s223 + $0x68] sm:$0xff] %v504
      %593 = vst [vmem:[%s223 + $0x70] sm:$0xff] %v509
      %594 = vst [vmem:[%s223 + $0x78] sm:$0xff] %v512
      %595 = vst [vmem:[%s223 + $0x80] sm:$0xff] %v517
      %596 = vst [vmem:[%s223 + $0x88] sm:$0xff] %v520
      %597 = vst [vmem:[%s223 + $0x90] sm:$0xff] %v525
      %598 = vst [vmem:[%s223 + $0x98] sm:$0xff] %v528
      %599 = vst [vmem:[%s223 + $0xa0] sm:$0xff] %v533
      %600 = vst [vmem:[%s223 + $0xa8] sm:$0xff] %v536
      %601 = vst [vmem:[%s223 + $0xb0] sm:$0xff] %v541
      %602 = vst [vmem:[%s223 + $0xb8] sm:$0xff] %v544
      %603 = vst [vmem:[%s223 + $0xc0] sm:$0xff] %v549
      %604 = vst [vmem:[%s223 + $0xc8] sm:$0xff] %v552
      %605 = vst [vmem:[%s223 + $0xd0] sm:$0xff] %v557
      %606 = vst [vmem:[%s223 + $0xd8] sm:$0xff] %v560
      %607 = vst [vmem:[%s223 + $0xe0] sm:$0xff] %v565
      %608 = vst [vmem:[%s223 + $0xe8] sm:$0xff] %v568
      %609 = vst [vmem:[%s223 + $0xf0] sm:$0xff] %v573
      %610 = vst [vmem:[%s223 + $0xf8] sm:$0xff] %v576
      %s611 = smul.u32 32, %s18
      %p612 = scmp.lt.s32.totalorder %s611, 127
      %s613 = scalar_select %p612, %s611, 127
      %p614 = scmp.lt.s32.totalorder %s19, 0
      %s615 = scalar_select %p614, %s19, 0
      %s616 = sadd.s32 %s615, %s613
      %s617 = smul.addr %s616, 8
      %s618 = scalar_lea.vmem %s3, %s617
      // Predicated region
      $region33: #{sphere_conv3_forward.1} parent=31 // pred_check
        %p619 = pneg %p124
      $region34: #{sphere_conv3_forward.1} parent=31 // pred_check_branch
        %621 = sbr.rel (%p619) target = $region36
      $region35: #{sphere_conv3_forward.1} parent=31 // pred_region
        %s622 = smul.u32 32, %s18
      $region36: #{sphere_conv3_forward.1} parent=31 // pred_fallthru
        _
    $region32: #{sphere_conv3_forward.1} parent=5 // pred_fallthru
      _
    %p623 = scmp.le.s32.totalorder 2, %s9
    // Predicated region
    $region37: #{sphere_conv3_forward.1} parent=5 // pred_check
      %p624 = pneg %p623
    $region38: #{sphere_conv3_forward.1} parent=5 // pred_check_branch
      %626 = sbr.rel (%p624) target = $region40
    $region39: #{sphere_conv3_forward.1} parent=5 // pred_region
      %s627 = ssub.s32 %s9, 2
      // Predicated region
      $region41: #{sphere_conv3_forward.1} parent=39 // pred_check
        %p628 = pneg %p130
      $region42: #{sphere_conv3_forward.1} parent=39 // pred_check_branch
        %630 = sbr.rel (%p628) target = $region44
      $region43: #{sphere_conv3_forward.1} parent=39 // pred_region
        %s631 = smul.u32 32, %s20
        %p632 = scmp.lt.s32.totalorder %s631, 127
        %s633 = scalar_select %p632, %s631, 127
        %p634 = scmp.lt.s32.totalorder %s21, 0
        %s635 = scalar_select %p634, %s21, 0
        %s636 = sadd.s32 %s635, %s633
        %s637 = smul.addr %s636, 8
        %s638 = scalar_lea.vmem %s3, %s637
      $region44: #{sphere_conv3_forward.1} parent=39 // pred_fallthru
        _
    $region40: #{sphere_conv3_forward.1} parent=5 // pred_fallthru
      _
  $region6: #{sphere_conv3_forward.1} parent=0 // loop_footer
    %s13 = sadd.s32 1, %s9
  $region7: #{sphere_conv3_forward.1} parent=0 // loop_footer_branch
    %8 = sbr.rel target = $region3
  $region8: #{sphere_conv3_forward.1} parent=0 // loop_exit
    _

</llo_original>
